<compile_context>
chip_gen: v6e
topology: v6e:2x2x1
jax: 0.10.0
libtpu: 0.0.40
codegen_flags: <defaults>
</compile_context>

<pallas_src>
import functools

import jax
import jax.numpy as jnp
from jax import lax
from jax.experimental import pallas as pl
from jax.experimental.pallas import tpu as pltpu
from jax.scipy.special import logsumexp


_NORM_EPS_SQ = 1e-24  # == (F.normalize eps = 1e-12) ** 2


# ------------------------------ small helpers ---------------------------------

def _sum_all(x):
    """Reduce a 2-D tile to a (1, 1) array (lane reduce, then sublane reduce)."""
    return jnp.sum(jnp.sum(x, axis=1, keepdims=True), axis=0, keepdims=True)


def _normalize_bf16(x, scale=1.0):
    """F.normalize(x, p=2, dim=-1) in f32 (rsqrt), optional scale, cast to bf16."""
    x = x.astype(jnp.float32)
    s = lax.rsqrt(jnp.maximum(jnp.sum(x * x, axis=-1, keepdims=True), _NORM_EPS_SQ))
    return (x * (s * scale)).astype(jnp.bfloat16)


def _pick_row_tile(batch):
    # Largest lane/MXU-friendly row tile that divides the batch (512/256 keep the
    # v6e/v7x 256-wide MXU full; all candidates are multiples of 8 so the
    # (8, 128) BlockSpec rule holds).  Fall back to a single full-size block.
    for cand in (512, 256, 128, 64, 32, 16, 8):
        if batch % cand == 0:
            return cand
    return batch


def _tile_offdiag_and_diag(s, row_offset):
    """Off-diagonal mask and per-row diagonal entries for a (tq, B) score slab."""
    tq, b = s.shape
    rows = lax.broadcasted_iota(jnp.int32, (tq, b), 0) + row_offset
    cols = lax.broadcasted_iota(jnp.int32, (tq, b), 1)
    off_diag = rows != cols
    dcol = jnp.sum(jnp.where(off_diag, 0.0, s), axis=1, keepdims=True)  # (tq, 1)
    return off_diag, dcol


# ------------------------ shared per-tile loss updates -------------------------

def _infonce_tile_update(s, row_offset, colm_ref, cols_ref, rowacc_ref,
                         diag_ref, *, single_exp):
    """Online accumulation of row/column log-sum-exp + diag over a (tq, B) slab."""
    _, dcol = _tile_offdiag_and_diag(s, row_offset)            # diag entries from s
    diag_ref[...] += _sum_all(dcol)

    m_r = jnp.max(s, axis=-1, keepdims=True)                   # (tq, 1) exact row max
    p = jnp.exp(s - m_r)
    row_lse = jnp.log(jnp.sum(p, axis=-1, keepdims=True)) + m_r
    rowacc_ref[...] += _sum_all(row_lse)

    m_old = colm_ref[...]                                       # (1, B)
    if single_exp:
        # Embeds path: |s| <= 1/temperature, so a single tile-wide reference is
        # safe and the big exp above is re-used for the column direction too
        # (halves EUP work; the EUP has a single VLIW slot).
        g = jnp.max(m_r, axis=0, keepdims=True)                 # (1, 1)
        m_new = jnp.maximum(m_old, g)
        contrib = (jnp.sum(p * jnp.exp(m_r - g), axis=0, keepdims=True)
                   * jnp.exp(g - m_new))
    else:
        # Precomputed-'scores' path: arbitrary magnitudes -> keep an exact
        # per-column running max (robust, standard flash-style merge).
        m_new = jnp.maximum(m_old, jnp.max(s, axis=0, keepdims=True))
        contrib = jnp.sum(jnp.exp(s - m_new), axis=0, keepdims=True)
    cols_ref[...] = cols_ref[...] * jnp.exp(m_old - m_new) + contrib
    colm_ref[...] = m_new


def _infonce_finalize(batch, colm_ref, cols_ref, rowacc_ref, diag_sum, o_ref):
    lse_col_sum = _sum_all(jnp.log(cols_ref[...]) + colm_ref[...])
    b = float(batch)
    o_ref[...] = 0.5 * (rowacc_ref[...] + lse_col_sum) / b - diag_sum / b


def _triplet_tile_update(s, drow, row_offset, margin, max_violation,
                         colmax_ref, i2t_ref, t2i_ref):
    off_diag, dcol = _tile_offdiag_and_diag(s, row_offset)
    cost_i2t = jnp.where(off_diag, jnp.maximum(margin + s - dcol, 0.0), 0.0)
    cost_t2i = jnp.where(off_diag, jnp.maximum(margin + s - drow, 0.0), 0.0)
    if max_violation:
        i2t_ref[...] += _sum_all(jnp.max(cost_i2t, axis=1, keepdims=True))
        colmax_ref[...] = jnp.maximum(colmax_ref[...],
                                      jnp.max(cost_t2i, axis=0, keepdims=True))
    else:
        i2t_ref[...] += _sum_all(cost_i2t)
        t2i_ref[...] += _sum_all(cost_t2i)


def _triplet_finalize(batch, max_violation, reduction, colmax_ref, i2t_ref,
                      t2i_ref, o_ref):
    if max_violation:
        total = i2t_ref[...] + _sum_all(colmax_ref[...])
        denom = float(batch)
    else:
        total = i2t_ref[...] + t2i_ref[...]
        denom = float(batch * batch)
    o_ref[...] = total if reduction == 'sum' else total / denom


# ---------------------------------- kernels ------------------------------------

def _embeds_loss_kernel(t_ref, i_ref, dr_ref, o_ref,
                        imn_ref, colm_ref, cols_ref, acc_a_ref, acc_b_ref, *,
                        temperature, margin, max_violation, reduction,
                        loss_type, batch, row_tile):
    step = pl.program_id(0)
    nsteps = pl.num_programs(0)
    infonce = loss_type == 'infonce'
    inv_t = 1.0 / temperature

    @pl.when(step == 0)
    def _init():
        # Normalize the image embeddings once (f32 rsqrt math, bf16 storage for
        # the MXU); they stay resident in VMEM for every row tile.
        im = i_ref[...].astype(jnp.float32)
        im_scale = lax.rsqrt(jnp.maximum(
            jnp.sum(im * im, axis=-1, keepdims=True), _NORM_EPS_SQ))
        imn_ref[...] = (im * im_scale).astype(jnp.bfloat16)
        colm_ref[...] = jnp.full_like(colm_ref, -jnp.inf if infonce else 0.0)
        cols_ref[...] = jnp.zeros_like(cols_ref)
        acc_a_ref[...] = jnp.zeros_like(acc_a_ref)
        acc_b_ref[...] = jnp.zeros_like(acc_b_ref)

    # Normalize this row tile of text embeddings (f32 math, bf16 MXU operands);
    # for InfoNCE fold 1/temperature into the text scale (no O(B^2) divide later).
    t = t_ref[...].astype(jnp.float32)                        # (tq, Dp)
    t_scale = lax.rsqrt(jnp.maximum(
        jnp.sum(t * t, axis=-1, keepdims=True), _NORM_EPS_SQ))
    if infonce:
        t_scale = t_scale * inv_t
    tn = (t * t_scale).astype(jnp.bfloat16)                   # (tq, Dp) bf16
    imn = imn_ref[...]                                        # (B, Dp) bf16

    # text @ image^T in NT form straight on the MXU (no materialized transpose).
    s = lax.dot_general(tn, imn, dimension_numbers=(((1,), (1,)), ((), ())),
                        preferred_element_type=jnp.float32)   # (tq, B) f32

    r0 = pl.multiple_of(step * row_tile, row_tile)

    if infonce:
        _infonce_tile_update(s, r0, colm_ref, cols_ref, acc_a_ref, acc_b_ref,
                             single_exp=True)

        @pl.when(step == nsteps - 1)
        def _done():
            _infonce_finalize(batch, colm_ref, cols_ref, acc_a_ref,
                              acc_b_ref[...], o_ref)
    else:
        drow = dr_ref[...].astype(jnp.float32)                # (1, B) full diagonal
        _triplet_tile_update(s, drow, r0, margin, max_violation,
                             colm_ref, acc_a_ref, acc_b_ref)

        @pl.when(step == nsteps - 1)
        def _done():
            _triplet_finalize(batch, max_violation, reduction, colm_ref,
                              acc_a_ref, acc_b_ref, o_ref)


def _scores_loss_kernel(s_ref, dr_ref, o_ref,
                        colm_ref, cols_ref, acc_a_ref, acc_b_ref, *,
                        temperature, margin, max_violation, reduction,
                        loss_type, batch, row_tile):
    step = pl.program_id(0)
    nsteps = pl.num_programs(0)
    infonce = loss_type == 'infonce'
    inv_t = 1.0 / temperature

    @pl.when(step == 0)
    def _init():
        colm_ref[...] = jnp.full_like(colm_ref, -jnp.inf if infonce else 0.0)
        cols_ref[...] = jnp.zeros_like(cols_ref)
        acc_a_ref[...] = jnp.zeros_like(acc_a_ref)
        acc_b_ref[...] = jnp.zeros_like(acc_b_ref)

    s_raw = s_ref[...].astype(jnp.float32)                    # (tq, B) row tile
    r0 = pl.multiple_of(step * row_tile, row_tile)

    if infonce:
        s = s_raw * inv_t                                     # multiply, not divide
        _infonce_tile_update(s, r0, colm_ref, cols_ref, acc_a_ref, acc_b_ref,
                             single_exp=False)

        @pl.when(step == nsteps - 1)
        def _done():
            _infonce_finalize(batch, colm_ref, cols_ref, acc_a_ref,
                              acc_b_ref[...], o_ref)
    else:
        drow = dr_ref[...].astype(jnp.float32)                # (1, B) full diagonal
        _triplet_tile_update(s_raw, drow, r0, margin, max_violation,
                             colm_ref, acc_a_ref, acc_b_ref)

        @pl.when(step == nsteps - 1)
        def _done():
            _triplet_finalize(batch, max_violation, reduction, colm_ref,
                              acc_a_ref, acc_b_ref, o_ref)


# ------------------------------- python wrapper ---------------------------------

class ContrastiveLoss:
    """JAX/Pallas port of the PyTorch ContrastiveLoss module (forward only)."""

    def __init__(self, temperature: float = 0.07, margin: float = 0.2,
                 max_violation: bool = True, reduction: str = 'mean',
                 loss_type: str = 'infonce', row_block=None):
        self.temperature = float(temperature)
        self.margin = float(margin)
        self.max_violation = bool(max_violation)
        self.reduction = reduction
        self.loss_type = loss_type
        self.row_block = row_block  # optional explicit row-tile override

    # -- config helpers --------------------------------------------------------
    def _static_kwargs(self, batch, row_tile):
        return dict(temperature=self.temperature, margin=self.margin,
                    max_violation=self.max_violation, reduction=self.reduction,
                    loss_type=self.loss_type, batch=batch, row_tile=row_tile)

    def _row_tile(self, batch):
        if self.row_block is not None:
            rb = int(self.row_block)
            if batch % rb != 0 or (rb % 8 != 0 and rb != batch):
                raise ValueError(f'row_block={rb} incompatible with batch={batch}')
            return rb
        return _pick_row_tile(batch)

    @staticmethod
    def _compiler_params():
        return pltpu.CompilerParams(
            dimension_semantics=("arbitrary",),   # row axis carries accumulators
            vmem_limit_bytes=48 * 1024 * 1024)

    # -- embeddings path -------------------------------------------------------
    def _loss_from_embeds(self, text_embeds, image_embeds):
        b, d = text_embeds.shape
        dp = max(128, ((d + 127) // 128) * 128)   # lane-dense vregs / full MXU tiles
        if dp != d:
            text_embeds = jnp.pad(text_embeds, ((0, 0), (0, dp - d)))
            image_embeds = jnp.pad(image_embeds, ((0, 0), (0, dp - d)))
        tq = self._row_tile(b)

        if self.loss_type == 'triplet':
            # Full score-matrix diagonal as a lane-major (1, B) row, computed with
            # the same bf16 rounding as the kernel's MXU operands.  Doing this
            # O(B*D) piece wrapper-side avoids a (B,1)->(1,B) relayout in-kernel;
            # all O(B^2*D) work stays in the kernel.
            tn = _normalize_bf16(text_embeds).astype(jnp.float32)
            imn = _normalize_bf16(image_embeds).astype(jnp.float32)
            diag_row = jnp.sum(tn * imn, axis=-1)[None, :]
        else:
            diag_row = jnp.zeros((1, b), jnp.float32)   # unused by the InfoNCE path

        kernel = functools.partial(_embeds_loss_kernel, **self._static_kwargs(b, tq))
        out = pl.pallas_call(
            kernel,
            out_shape=jax.ShapeDtypeStruct((1, 1), jnp.float32),
            grid_spec=pltpu.PrefetchScalarGridSpec(
                num_scalar_prefetch=0,
                grid=(b // tq,),
                in_specs=[
                    pl.BlockSpec((tq, dp), lambda i: (i, 0)),   # text: row tiles
                    pl.BlockSpec((b, dp), lambda i: (0, 0)),    # image: resident
                    pl.BlockSpec((1, b), lambda i: (0, 0)),     # diag row: resident
                ],
                out_specs=pl.BlockSpec((1, 1), lambda i: (0, 0)),
                scratch_shapes=[
                    pltpu.VMEM((b, dp), jnp.bfloat16),  # normalized image embeds
                    pltpu.VMEM((1, b), jnp.float32),    # running col max / col cost max
                    pltpu.VMEM((1, b), jnp.float32),    # running col sum-exp
                    pltpu.VMEM((1, 1), jnp.float32),    # row-LSE / i2t accumulator
                    pltpu.VMEM((1, 1), jnp.float32),    # diag / t2i accumulator
                ]),
            compiler_params=self._compiler_params(),
        )(text_embeds, image_embeds, diag_row)
        return out[0, 0]

    # -- precomputed-scores path ------------------------------------------------
    def _loss_from_scores(self, scores):
        b = scores.shape[0]
        tq = self._row_tile(b)
        # O(B) data plumbing: the diagonal of the precomputed score matrix as a
        # lane-major (1, B) row (needed across all row tiles for triplet drow).
        diag_row = jnp.diagonal(scores).astype(jnp.float32)[None, :]

        kernel = functools.partial(_scores_loss_kernel, **self._static_kwargs(b, tq))
        out = pl.pallas_call(
            kernel,
            out_shape=jax.ShapeDtypeStruct((1, 1), jnp.float32),
            grid_spec=pltpu.PrefetchScalarGridSpec(
                num_scalar_prefetch=0,
                grid=(b // tq,),
                in_specs=[
                    pl.BlockSpec((tq, b), lambda i: (i, 0)),    # score row tiles
                    pl.BlockSpec((1, b), lambda i: (0, 0)),     # diagonal: resident
                ],
                out_specs=pl.BlockSpec((1, 1), lambda i: (0, 0)),
                scratch_shapes=[
                    pltpu.VMEM((1, b), jnp.float32),
                    pltpu.VMEM((1, b), jnp.float32),
                    pltpu.VMEM((1, 1), jnp.float32),
                    pltpu.VMEM((1, 1), jnp.float32),
                ]),
            compiler_params=self._compiler_params(),
        )(scores, diag_row)
        return out[0, 0]

    # -- forward ----------------------------------------------------------------
    def __call__(self, outputs, batch=None):
        if self.loss_type not in ('infonce', 'triplet'):
            raise ValueError(f'Unsupported loss type: {self.loss_type}')
        if 'scores' in outputs:
            return self._loss_from_scores(outputs['scores'])
        if 'text_embeds' in outputs and 'image_embeds' in outputs:
            return self._loss_from_embeds(outputs['text_embeds'],
                                          outputs['image_embeds'])
        raise ValueError("Outputs must contain either 'scores' or both "
                         "'text_embeds' and 'image_embeds'")


# --------------------------- pure-JAX reference checks ---------------------------

def _ref_scores_from_embeds(text, image, text_scale=1.0):
    # Mirrors the kernel precision: f32 normalization, bf16 operands, f32 accum.
    tn = _normalize_bf16(text, text_scale).astype(jnp.float32)
    imn = _normalize_bf16(image).astype(jnp.float32)
    return tn @ imn.T


def _ref_infonce(scores, temperature):
    s = scores / temperature
    diag = jnp.diagonal(s)
    i2t = jnp.mean(logsumexp(s, axis=1) - diag)
    t2i = jnp.mean(logsumexp(s, axis=0) - diag)
    return 0.5 * (i2t + t2i)


def _ref_triplet(scores, margin, max_violation, reduction):
    b = scores.shape[0]
    diag = jnp.diagonal(scores)
    eye = jnp.eye(b, dtype=bool)
    cost_i2t = jnp.where(eye, 0.0, jnp.maximum(margin + scores - diag[:, None], 0.0))
    cost_t2i = jnp.where(eye, 0.0, jnp.maximum(margin + scores - diag[None, :], 0.0))
    if max_violation:
        cost_i2t = cost_i2t.max(axis=1)
        cost_t2i = cost_t2i.max(axis=0)
    if reduction == 'sum':
        return cost_i2t.sum() + cost_t2i.sum()
    return cost_i2t.mean() + cost_t2i.mean()


if __name__ == "__main__":
    key = jax.random.PRNGKey(0)
    k_text, k_img = jax.random.split(key)
    batch, hidden = 16, 32
    text = jax.random.normal(k_text, (batch, hidden), dtype=jnp.float32)
    image = jax.random.normal(k_img, (batch, hidden), dtype=jnp.float32)

    temperature, margin = 0.07, 0.2
    ref_scores = _ref_scores_from_embeds(text, image)                     # unscaled
    ref_scaled = _ref_scores_from_embeds(text, image, 1.0 / temperature)  # 1/T folded

    # 1) InfoNCE from embeddings, forced multi-tile grid (two row tiles of 8).
    loss_fn = ContrastiveLoss(temperature=temperature, row_block=8)
    loss = jax.block_until_ready(
        loss_fn({'text_embeds': text, 'image_embeds': image}, {}))
    ref = _ref_infonce(ref_scaled, 1.0)
    assert jnp.allclose(loss, ref, atol=1e-4, rtol=1e-4), (loss, ref)

    # Same loss with the default (single-tile) schedule.
    loss1 = jax.block_until_ready(ContrastiveLoss(temperature=temperature)(
        {'text_embeds': text, 'image_embeds': image}, {}))
    assert jnp.allclose(loss1, ref, atol=1e-4, rtol=1e-4), (loss1, ref)

    # Sanity: bf16 operands stay close to a pure-f32 formulation of the module.
    tn32 = text / jnp.linalg.norm(text, axis=-1, keepdims=True)
    in32 = image / jnp.linalg.norm(image, axis=-1, keepdims=True)
    ref_f32 = _ref_infonce(tn32 @ in32.T, temperature)
    assert jnp.allclose(loss, ref_f32, atol=1e-1), (loss, ref_f32)

    # 2) Triplet with hard-negative mining, multi-tile.
    trip_fn = ContrastiveLoss(loss_type='triplet', margin=margin,
                              max_violation=True, row_block=8)
    trip = jax.block_until_ready(
        trip_fn({'text_embeds': text, 'image_embeds': image}, {}))
    trip_ref = _ref_triplet(ref_scores, margin, True, 'mean')
    assert jnp.allclose(trip, trip_ref, atol=1e-4, rtol=1e-4), (trip, trip_ref)

    # 3) Triplet without mining, sum reduction.
    trip2_fn = ContrastiveLoss(loss_type='triplet', margin=margin,
                               max_violation=False, reduction='sum', row_block=8)
    trip2 = jax.block_until_ready(
        trip2_fn({'text_embeds': text, 'image_embeds': image}, {}))
    trip2_ref = _ref_triplet(ref_scores, margin, False, 'sum')
    assert jnp.allclose(trip2, trip2_ref, atol=1e-3, rtol=1e-4), (trip2, trip2_ref)

    # 4) Precomputed-'scores' path (f32 end to end), InfoNCE + triplet.
    s_info = jax.block_until_ready(
        ContrastiveLoss(temperature=temperature, row_block=8)({'scores': ref_scores}, {}))
    s_info_ref = _ref_infonce(ref_scores, temperature)
    assert jnp.allclose(s_info, s_info_ref, atol=1e-4, rtol=1e-4), (s_info, s_info_ref)

    s_trip = jax.block_until_ready(
        ContrastiveLoss(loss_type='triplet', margin=margin, max_violation=True,
                        row_block=8)({'scores': ref_scores}, {}))
    s_trip_ref = _ref_triplet(ref_scores, margin, True, 'mean')
    assert jnp.allclose(s_trip, s_trip_ref, atol=1e-4, rtol=1e-4), (s_trip, s_trip_ref)

    print("KERNEL_OK")
</pallas_src>

<mosaic_0001>
module attributes {stable_mosaic.version = 11 : i64} {
  func.func @_embeds_loss_kernel(%arg0: i32, %arg1: memref<8x128xf32, #tpu.memory_space<vmem>>, %arg2: memref<16x128xf32, #tpu.memory_space<vmem>>, %arg3: memref<1x16xf32, #tpu.memory_space<vmem>>, %arg4: memref<1x1xf32, #tpu.memory_space<vmem>>, %arg5: memref<16x128xbf16, #tpu.memory_space<vmem>>, %arg6: memref<1x16xf32, #tpu.memory_space<vmem>>, %arg7: memref<1x16xf32, #tpu.memory_space<vmem>>, %arg8: memref<1x1xf32, #tpu.memory_space<vmem>>, %arg9: memref<1x1xf32, #tpu.memory_space<vmem>>) attributes {dimension_semantics = [#tpu.dimension_semantics<arbitrary>], iteration_bounds = array<i64: 2>, scalar_prefetch = 0 : i64, scratch_operands = 5 : i64, tpu.core_type = #tpu.core_type<tc>, window_params = [{transform_indices = @transform_0, window_bounds = array<i64: 8, 128>}, {pipeline_mode = #tpu.pipeline_mode<synchronous>, transform_indices = @transform_1, window_bounds = array<i64: 16, 128>}, {pipeline_mode = #tpu.pipeline_mode<synchronous>, transform_indices = @transform_2, window_bounds = array<i64: 1, 16>}, {pipeline_mode = #tpu.pipeline_mode<synchronous>, transform_indices = @transform_3, window_bounds = array<i64: 1, 1>}]} {
    %c0_i32 = arith.constant 0 : i32
    %0 = arith.cmpi eq, %arg0, %c0_i32 : i32
    %1 = arith.extui %0 : i1 to i32
    %c0_i32_0 = arith.constant 0 : i32
    %2 = arith.cmpi ne, %1, %c0_i32_0 : i32
    scf.if %2 {
      %c0_34 = arith.constant 0 : index
      %c0_35 = arith.constant 0 : index
      %77 = vector.load %arg2[%c0_34, %c0_35] : memref<16x128xf32, #tpu.memory_space<vmem>>, vector<16x128xf32>
      %78 = arith.mulf %77, %77 : vector<16x128xf32>
      %cst_36 = arith.constant dense<0.000000e+00> : vector<16xf32>
      %79 = vector.multi_reduction <add>, %78, %cst_36 [1] : vector<16x128xf32> to vector<16xf32>
      %80 = vector.shape_cast %79 : vector<16xf32> to vector<16x1xf32>
      %cst_37 = arith.constant 1.000000e-24 : f32
      %81 = vector.broadcast %cst_37 : f32 to vector<16x1xf32>
      %82 = arith.maximumf %80, %81 : vector<16x1xf32>
      %83 = math.rsqrt %82 : vector<16x1xf32>
      %84 = vector.broadcast %83 : vector<16x1xf32> to vector<16x128xf32>
      %85 = arith.mulf %77, %84 : vector<16x128xf32>
      %86 = arith.truncf %85 : vector<16x128xf32> to vector<16x128xbf16>
      %c0_38 = arith.constant 0 : index
      %c0_39 = arith.constant 0 : index
      %87 = vector.load %arg5[%c0_38, %c0_39] : memref<16x128xbf16, #tpu.memory_space<vmem>>, vector<16x128xbf16>
      tpu.vector_store %arg5[%c0_38, %c0_39], %86 {strides = array<i32>} : memref<16x128xbf16, #tpu.memory_space<vmem>>, vector<16x128xbf16>,
      %cst_40 = arith.constant 0xFF800000 : f32
      %88 = vector.broadcast %cst_40 : f32 to vector<1x16xf32>
      %c0_41 = arith.constant 0 : index
      %c0_42 = arith.constant 0 : index
      %89 = vector.load %arg6[%c0_41, %c0_42] : memref<1x16xf32, #tpu.memory_space<vmem>>, vector<1x16xf32>
      tpu.vector_store %arg6[%c0_41, %c0_42], %88 {strides = array<i32>} : memref<1x16xf32, #tpu.memory_space<vmem>>, vector<1x16xf32>,
      %cst_43 = arith.constant 0.000000e+00 : f32
      %90 = vector.broadcast %cst_43 : f32 to vector<1x16xf32>
      %c0_44 = arith.constant 0 : index
      %c0_45 = arith.constant 0 : index
      %91 = vector.load %arg7[%c0_44, %c0_45] : memref<1x16xf32, #tpu.memory_space<vmem>>, vector<1x16xf32>
      tpu.vector_store %arg7[%c0_44, %c0_45], %90 {strides = array<i32>} : memref<1x16xf32, #tpu.memory_space<vmem>>, vector<1x16xf32>,
      %cst_46 = arith.constant 0.000000e+00 : f32
      %92 = vector.broadcast %cst_46 : f32 to vector<1x1xf32>
      %c0_47 = arith.constant 0 : index
      %c0_48 = arith.constant 0 : index
      %93 = vector.load %arg8[%c0_47, %c0_48] : memref<1x1xf32, #tpu.memory_space<vmem>>, vector<1x1xf32>
      tpu.vector_store %arg8[%c0_47, %c0_48], %92 {strides = array<i32>} : memref<1x1xf32, #tpu.memory_space<vmem>>, vector<1x1xf32>,
      %cst_49 = arith.constant 0.000000e+00 : f32
      %94 = vector.broadcast %cst_49 : f32 to vector<1x1xf32>
      %c0_50 = arith.constant 0 : index
      %c0_51 = arith.constant 0 : index
      %95 = vector.load %arg9[%c0_50, %c0_51] : memref<1x1xf32, #tpu.memory_space<vmem>>, vector<1x1xf32>
      tpu.vector_store %arg9[%c0_50, %c0_51], %94 {strides = array<i32>} : memref<1x1xf32, #tpu.memory_space<vmem>>, vector<1x1xf32>,
    } else {
    }
    %c0 = arith.constant 0 : index
    %c0_1 = arith.constant 0 : index
    %3 = vector.load %arg1[%c0, %c0_1] : memref<8x128xf32, #tpu.memory_space<vmem>>, vector<8x128xf32>
    %4 = arith.mulf %3, %3 : vector<8x128xf32>
    %cst = arith.constant dense<0.000000e+00> : vector<8xf32>
    %5 = vector.multi_reduction <add>, %4, %cst [1] : vector<8x128xf32> to vector<8xf32>
    %6 = vector.shape_cast %5 : vector<8xf32> to vector<8x1xf32>
    %cst_2 = arith.constant 1.000000e-24 : f32
    %7 = vector.broadcast %cst_2 : f32 to vector<8x1xf32>
    %8 = arith.maximumf %6, %7 : vector<8x1xf32>
    %9 = math.rsqrt %8 : vector<8x1xf32>
    %cst_3 = arith.constant 14.2857141 : f32
    %10 = vector.broadcast %cst_3 : f32 to vector<8x1xf32>
    %11 = arith.mulf %9, %10 : vector<8x1xf32>
    %12 = vector.broadcast %11 : vector<8x1xf32> to vector<8x128xf32>
    %13 = arith.mulf %3, %12 : vector<8x128xf32>
    %14 = arith.truncf %13 : vector<8x128xf32> to vector<8x128xbf16>
    %c0_4 = arith.constant 0 : index
    %c0_5 = arith.constant 0 : index
    %15 = vector.load %arg5[%c0_4, %c0_5] : memref<16x128xbf16, #tpu.memory_space<vmem>>, vector<16x128xbf16>
    %cst_6 = arith.constant dense<0.000000e+00> : vector<8x16xf32>
    %16 = tpu.matmul %14, %15, %cst_6 {dimension_numbers = #tpu.dot_dimension_numbers<[1], [1], [0], [0], [0, 0, 1, 0], [], []>} : vector<8x128xbf16>, vector<16x128xbf16>, vector<8x16xf32> -> vector<8x16xf32>
    %c8_i32 = arith.constant 8 : i32
    %17 = arith.muli %arg0, %c8_i32 : i32
    %18 = tpu.assume_multiple %17, 8 : i32
    %19 = tpu.iota {dimensions = array<i32: 0>} : vector<8x16xi32>
    %20 = vector.broadcast %18 : i32 to vector<8x16xi32>
    %21 = arith.addi %19, %20 : vector<8x16xi32>
    %22 = tpu.iota {dimensions = array<i32: 1>} : vector<8x16xi32>
    %23 = arith.cmpi ne, %21, %22 : vector<8x16xi32>
    %cst_7 = arith.constant 0.000000e+00 : f32
    %24 = vector.broadcast %cst_7 : f32 to vector<8x16xf32>
    %25 = arith.select %23, %24, %16 : vector<8x16xi1>, vector<8x16xf32>
    %cst_8 = arith.constant dense<0.000000e+00> : vector<8xf32>
    %26 = vector.multi_reduction <add>, %25, %cst_8 [1] : vector<8x16xf32> to vector<8xf32>
    %27 = vector.shape_cast %26 : vector<8xf32> to vector<8x1xf32>
    %c0_9 = arith.constant 0 : index
    %c0_10 = arith.constant 0 : index
    %28 = vector.load %arg9[%c0_9, %c0_10] : memref<1x1xf32, #tpu.memory_space<vmem>>, vector<1x1xf32>
    %cst_11 = arith.constant dense<0.000000e+00> : vector<8xf32>
    %29 = vector.multi_reduction <add>, %27, %cst_11 [1] : vector<8x1xf32> to vector<8xf32>
    %30 = vector.shape_cast %29 : vector<8xf32> to vector<8x1xf32>
    %cst_12 = arith.constant dense<0.000000e+00> : vector<1xf32>
    %31 = vector.multi_reduction <add>, %30, %cst_12 [0] : vector<8x1xf32> to vector<1xf32>
    %32 = vector.shape_cast %31 : vector<1xf32> to vector<1x1xf32>
    %33 = arith.addf %28, %32 : vector<1x1xf32>
    %c0_13 = arith.constant 0 : index
    %c0_14 = arith.constant 0 : index
    %34 = vector.load %arg9[%c0_13, %c0_14] : memref<1x1xf32, #tpu.memory_space<vmem>>, vector<1x1xf32>
    tpu.vector_store %arg9[%c0_13, %c0_14], %33 {strides = array<i32>} : memref<1x1xf32, #tpu.memory_space<vmem>>, vector<1x1xf32>,
    %cst_15 = arith.constant dense<0xFF800000> : vector<8xf32>
    %35 = vector.multi_reduction <maximumf>, %16, %cst_15 [1] : vector<8x16xf32> to vector<8xf32>
    %36 = vector.shape_cast %35 : vector<8xf32> to vector<8x1xf32>
    %37 = vector.broadcast %36 : vector<8x1xf32> to vector<8x16xf32>
    %38 = arith.subf %16, %37 : vector<8x16xf32>
    %39 = math.exp %38 : vector<8x16xf32>
    %cst_16 = arith.constant dense<0.000000e+00> : vector<8xf32>
    %40 = vector.multi_reduction <add>, %39, %cst_16 [1] : vector<8x16xf32> to vector<8xf32>
    %41 = vector.shape_cast %40 : vector<8xf32> to vector<8x1xf32>
    %42 = math.log %41 : vector<8x1xf32>
    %43 = arith.addf %42, %36 : vector<8x1xf32>
    %c0_17 = arith.constant 0 : index
    %c0_18 = arith.constant 0 : index
    %44 = vector.load %arg8[%c0_17, %c0_18] : memref<1x1xf32, #tpu.memory_space<vmem>>, vector<1x1xf32>
    %cst_19 = arith.constant dense<0.000000e+00> : vector<8xf32>
    %45 = vector.multi_reduction <add>, %43, %cst_19 [1] : vector<8x1xf32> to vector<8xf32>
    %46 = vector.shape_cast %45 : vector<8xf32> to vector<8x1xf32>
    %cst_20 = arith.constant dense<0.000000e+00> : vector<1xf32>
    %47 = vector.multi_reduction <add>, %46, %cst_20 [0] : vector<8x1xf32> to vector<1xf32>
    %48 = vector.shape_cast %47 : vector<1xf32> to vector<1x1xf32>
    %49 = arith.addf %44, %48 : vector<1x1xf32>
    %c0_21 = arith.constant 0 : index
    %c0_22 = arith.constant 0 : index
    %50 = vector.load %arg8[%c0_21, %c0_22] : memref<1x1xf32, #tpu.memory_space<vmem>>, vector<1x1xf32>
    tpu.vector_store %arg8[%c0_21, %c0_22], %49 {strides = array<i32>} : memref<1x1xf32, #tpu.memory_space<vmem>>, vector<1x1xf32>,
    %c0_23 = arith.constant 0 : index
    %c0_24 = arith.constant 0 : index
    %51 = vector.load %arg6[%c0_23, %c0_24] : memref<1x16xf32, #tpu.memory_space<vmem>>, vector<1x16xf32>
    %cst_25 = arith.constant dense<0xFF800000> : vector<1xf32>
    %52 = vector.multi_reduction <maximumf>, %36, %cst_25 [0] : vector<8x1xf32> to vector<1xf32>
    %53 = vector.shape_cast %52 : vector<1xf32> to vector<1x1xf32>
    %54 = vector.broadcast %53 : vector<1x1xf32> to vector<1x16xf32>
    %55 = arith.maximumf %51, %54 : vector<1x16xf32>
    %56 = vector.broadcast %53 : vector<1x1xf32> to vector<8x1xf32>
    %57 = arith.subf %36, %56 : vector<8x1xf32>
    %58 = math.exp %57 : vector<8x1xf32>
    %59 = vector.broadcast %58 : vector<8x1xf32> to vector<8x16xf32>
    %60 = arith.mulf %39, %59 : vector<8x16xf32>
    %cst_26 = arith.constant dense<0.000000e+00> : vector<16xf32>
    %61 = vector.multi_reduction <add>, %60, %cst_26 [0] : vector<8x16xf32> to vector<16xf32>
    %62 = vector.shape_cast %61 : vector<16xf32> to vector<1x16xf32>
    %63 = vector.broadcast %53 : vector<1x1xf32> to vector<1x16xf32>
    %64 = arith.subf %63, %55 : vector<1x16xf32>
    %65 = math.exp %64 : vector<1x16xf32>
    %66 = arith.mulf %62, %65 : vector<1x16xf32>
    %c0_27 = arith.constant 0 : index
    %c0_28 = arith.constant 0 : index
    %67 = vector.load %arg7[%c0_27, %c0_28] : memref<1x16xf32, #tpu.memory_space<vmem>>, vector<1x16xf32>
    %68 = arith.subf %51, %55 : vector<1x16xf32>
    %69 = math.exp %68 : vector<1x16xf32>
    %70 = arith.mulf %67, %69 : vector<1x16xf32>
    %71 = arith.addf %70, %66 : vector<1x16xf32>
    %c0_29 = arith.constant 0 : index
    %c0_30 = arith.constant 0 : index
    %72 = vector.load %arg7[%c0_29, %c0_30] : memref<1x16xf32, #tpu.memory_space<vmem>>, vector<1x16xf32>
    tpu.vector_store %arg7[%c0_29, %c0_30], %71 {strides = array<i32>} : memref<1x16xf32, #tpu.memory_space<vmem>>, vector<1x16xf32>,
    %c0_31 = arith.constant 0 : index
    %c0_32 = arith.constant 0 : index
    %73 = vector.load %arg6[%c0_31, %c0_32] : memref<1x16xf32, #tpu.memory_space<vmem>>, vector<1x16xf32>
    tpu.vector_store %arg6[%c0_31, %c0_32], %55 {strides = array<i32>} : memref<1x16xf32, #tpu.memory_space<vmem>>, vector<1x16xf32>,
    %c1_i32 = arith.constant 1 : i32
    %74 = arith.cmpi eq, %arg0, %c1_i32 : i32
    %75 = arith.extui %74 : i1 to i32
    %c0_i32_33 = arith.constant 0 : i32
    %76 = arith.cmpi ne, %75, %c0_i32_33 : i32
    scf.if %76 {
      %c0_34 = arith.constant 0 : index
      %c0_35 = arith.constant 0 : index
      %77 = vector.load %arg9[%c0_34, %c0_35] : memref<1x1xf32, #tpu.memory_space<vmem>>, vector<1x1xf32>
      %c0_36 = arith.constant 0 : index
      %c0_37 = arith.constant 0 : index
      %78 = vector.load %arg7[%c0_36, %c0_37] : memref<1x16xf32, #tpu.memory_space<vmem>>, vector<1x16xf32>
      %79 = math.log %78 : vector<1x16xf32>
      %c0_38 = arith.constant 0 : index
      %c0_39 = arith.constant 0 : index
      %80 = vector.load %arg6[%c0_38, %c0_39] : memref<1x16xf32, #tpu.memory_space<vmem>>, vector<1x16xf32>
      %81 = arith.addf %79, %80 : vector<1x16xf32>
      %cst_40 = arith.constant dense<0.000000e+00> : vector<1xf32>
      %82 = vector.multi_reduction <add>, %81, %cst_40 [1] : vector<1x16xf32> to vector<1xf32>
      %83 = vector.shape_cast %82 : vector<1xf32> to vector<1x1xf32>
      %cst_41 = arith.constant dense<0.000000e+00> : vector<1xf32>
      %84 = vector.multi_reduction <add>, %83, %cst_41 [0] : vector<1x1xf32> to vector<1xf32>
      %85 = vector.shape_cast %84 : vector<1xf32> to vector<1x1xf32>
      %c0_42 = arith.constant 0 : index
      %c0_43 = arith.constant 0 : index
      %86 = vector.load %arg8[%c0_42, %c0_43] : memref<1x1xf32, #tpu.memory_space<vmem>>, vector<1x1xf32>
      %87 = arith.addf %86, %85 : vector<1x1xf32>
      %cst_44 = arith.constant 5.000000e-01 : f32
      %88 = vector.broadcast %cst_44 : f32 to vector<1x1xf32>
      %89 = arith.mulf %88, %87 : vector<1x1xf32>
      %cst_45 = arith.constant 1.600000e+01 : f32
      %90 = vector.broadcast %cst_45 : f32 to vector<1x1xf32>
      %91 = arith.divf %89, %90 : vector<1x1xf32>
      %cst_46 = arith.constant 1.600000e+01 : f32
      %92 = vector.broadcast %cst_46 : f32 to vector<1x1xf32>
      %93 = arith.divf %77, %92 : vector<1x1xf32>
      %94 = arith.subf %91, %93 : vector<1x1xf32>
      %c0_47 = arith.constant 0 : index
      %c0_48 = arith.constant 0 : index
      %95 = vector.load %arg4[%c0_47, %c0_48] : memref<1x1xf32, #tpu.memory_space<vmem>>, vector<1x1xf32>
      tpu.vector_store %arg4[%c0_47, %c0_48], %94 {strides = array<i32>} : memref<1x1xf32, #tpu.memory_space<vmem>>, vector<1x1xf32>,
    } else {
    }
    return
  }
  func.func @transform_0(%arg0: i32) -> (i32, i32) {
    %c0_i32 = arith.constant 0 : i32
    %c0_i32_0 = arith.constant 0 : i32
    return %arg0, %c0_i32 : i32, i32
  }
  func.func @transform_1(%arg0: i32) -> (i32, i32) {
    %c0_i32 = arith.constant 0 : i32
    %c0_i32_0 = arith.constant 0 : i32
    %c0_i32_1 = arith.constant 0 : i32
    return %c0_i32, %c0_i32_0 : i32, i32
  }
  func.func @transform_2(%arg0: i32) -> (i32, i32) {
    %c0_i32 = arith.constant 0 : i32
    %c0_i32_0 = arith.constant 0 : i32
    %c0_i32_1 = arith.constant 0 : i32
    return %c0_i32, %c0_i32_0 : i32, i32
  }
  func.func @transform_3(%arg0: i32) -> (i32, i32) {
    %c0_i32 = arith.constant 0 : i32
    %c0_i32_0 = arith.constant 0 : i32
    %c0_i32_1 = arith.constant 0 : i32
    return %c0_i32, %c0_i32_0 : i32, i32
  }
}

</mosaic_0001>

<llo_original>
// kernel: tpu_custom_call.1
$region0: #{tpu_custom_call.1}
  #allocation0 [shape = 'u32[]', space=smem, size = 0x4, offset = 0x4, fixed_abs, tag = 'smem constant byte address 0x4 - core index']
  #allocation1 [shape = 'u32[144,128]{1,0:T(1,128)}', space=vmem, size = 0x12000, scoped, tag = 'internal scratch']
  #allocation2 [shape = 'bf16[16,128]{1,0:T(8,128)(2,1)}', space=vmem, size = 0x1000, scoped, tag = 'scratch operand']
  #allocation3 [shape = 'f32[1,16]{1,0:T(1,128)}', space=vmem, size = 0x200, scoped, tag = 'scratch operand']
  #allocation4 [shape = 'f32[1,16]{1,0:T(1,128)}', space=vmem, size = 0x200, scoped, tag = 'scratch operand']
  #allocation5 [shape = 'f32[1,1]{1,0:T(1,128)}', space=vmem, size = 0x200, scoped, tag = 'scratch operand']
  #allocation6 [shape = 'f32[1,1]{1,0:T(1,128)}', space=vmem, size = 0x200, scoped, tag = 'scratch operand']
  %s0 = inlined_call_operand.hbm [shape: f32[16,128], index: 0, kind: input, shape index: {}]
  %s1 = inlined_call_operand.hbm [shape: f32[16,128], index: 1, kind: input, shape index: {}]
  %s2 = inlined_call_operand.vmem [shape: f32[1,16], index: 2, kind: input, shape index: {}]
  %s3 = inlined_call_operand.hbm [shape: f32[1,1], index: 3, kind: output, shape index: {}]
  %s4 = sld [smem:[#allocation0]]
  $region61: #{tpu_custom_call.1} parent=0
    _
  %s6 = ssub.s32 1, %s4
  %s7 = scalar_select 0, %s6, %s4
  $region1: #{tpu_custom_call.1} parent=0
    #allocation7 [shape = 'u8[8192]{0}', space=vmem, size = 0x2000, scoped, tag = 'input window, operand 0']
    #allocation8 [shape = 's32[2]{0}', space=sflag, size = 0x8, scoped, tag = 'scoped memory for tpu_custom_call.1']
    #allocation9 [shape = 's32[2]{0}', space=sflag, size = 0x8, scoped, tag = 'scoped memory for tpu_custom_call.1']
    #allocation10 [shape = 'u8[8192]{0}', space=vmem, size = 0x2000, scoped, tag = 'input window, operand 1, single buffered']
    #allocation11 [shape = 's32[1]{0}', space=sflag, size = 0x4, scoped, tag = 'scoped memory for tpu_custom_call.1']
    #allocation12 [shape = 'u8[512]{0}', space=vmem, size = 0x400, scoped, tag = 'output window, operand 0, single buffered']
    %8 = vsyncpa [#allocation8], 0
    %s9 = scalar_lea.sflag [#allocation8], 1
    %10 = vsyncpa %s9, 0
    %11 = vsyncpa [#allocation11], 0
    %12 = vsyncpa [#allocation9], 0
    loop: start=0, step=1, limit=4
    $region2: #{tpu_custom_call.1} parent=1 // loop_pre_header
      _
    $region3: #{tpu_custom_call.1} parent=1 // loop_header
      %s14 = sphi 0, %s18
      %p15 = scmp.ge.s32.totalorder %s14, 4
      %s24 = sphi 0, %s26
      %s27 = sphi 0, %s24
      %s28 = sphi 0, %s27
      %s44 = sphi 0, %s28
      %s48 = sphi 0, %s48
      %s50 = sphi 0, %s48
      %s51 = sphi 0, %s50
      %s65 = sphi 0, %s51
      %s69 = sphi 0, %s69
      %s71 = sphi 0, %s69
      %s72 = sphi 0, %s71
      %s86 = sphi 0, %s72
      %s90 = sphi 0, %s90
      %s92 = sphi 0, %s90
      %s93 = sphi 0, %s92
      %s107 = sphi 0, %s93
    $region4: #{tpu_custom_call.1} parent=1 // loop_header_branch
      %17 = sbr.rel (%p15) target = $region8
    $region5: #{tpu_custom_call.1} parent=1 // loop_body
      %s19 = ssub.s32 %s14, 1
      %s20 = ssub.s32 %s14, 2
      %s21 = sadd.s32 %s14, 1
      %s22 = ssub.s32 %s14, %s21
      %p23 = scmp.eq.s32.totalorder %s22, 0
      %s25 = sadd.s32 %s24, 1
      %s26 = scalar_select %p23, %s24, %s25
      %p29 = pneg %p23
      %p30 = scmp.eq.s32.totalorder %s14, 1
      %p31 = por %p29, %p30
      %p32 = scmp.ne.s32.totalorder %s24, %s27
      %p33 = scmp.eq.s32.totalorder %s14, 0
      %p34 = por %p32, %p33
      %p35 = scmp.ne.s32.totalorder %s24, %s27
      %p36 = scmp.eq.s32.totalorder %s19, 1
      %p37 = por %p35, %p36
      %p38 = scmp.ne.s32.totalorder %s27, %s28
      %p39 = scmp.eq.s32.totalorder %s19, 0
      %p40 = por %p38, %p39
      %p41 = scmp.ne.s32.totalorder %s27, %s28
      %p42 = scmp.eq.s32.totalorder %s20, 1
      %p43 = por %p41, %p42
      %p45 = scmp.ne.s32.totalorder %s28, %s44
      %p46 = scmp.eq.s32.totalorder %s20, 0
      %p47 = por %p45, %p46
      %s49 = sadd.s32 %s48, 1
      %p52 = scmp.eq.s32.totalorder %s14, 1
      %p53 = scmp.ne.s32.totalorder %s48, %s50
      %p54 = scmp.eq.s32.totalorder %s14, 0
      %p55 = por %p53, %p54
      %p56 = scmp.ne.s32.totalorder %s48, %s50
      %p57 = scmp.eq.s32.totalorder %s19, 1
      %p58 = por %p56, %p57
      %p59 = scmp.ne.s32.totalorder %s50, %s51
      %p60 = scmp.eq.s32.totalorder %s19, 0
      %p61 = por %p59, %p60
      %p62 = scmp.ne.s32.totalorder %s50, %s51
      %p63 = scmp.eq.s32.totalorder %s20, 1
      %p64 = por %p62, %p63
      %p66 = scmp.ne.s32.totalorder %s51, %s65
      %p67 = scmp.eq.s32.totalorder %s20, 0
      %p68 = por %p66, %p67
      %s70 = sadd.s32 %s69, 1
      %p73 = scmp.eq.s32.totalorder %s14, 1
      %p74 = scmp.ne.s32.totalorder %s69, %s71
      %p75 = scmp.eq.s32.totalorder %s14, 0
      %p76 = por %p74, %p75
      %p77 = scmp.ne.s32.totalorder %s69, %s71
      %p78 = scmp.eq.s32.totalorder %s19, 1
      %p79 = por %p77, %p78
      %p80 = scmp.ne.s32.totalorder %s71, %s72
      %p81 = scmp.eq.s32.totalorder %s19, 0
      %p82 = por %p80, %p81
      %p83 = scmp.ne.s32.totalorder %s71, %s72
      %p84 = scmp.eq.s32.totalorder %s20, 1
      %p85 = por %p83, %p84
      %p87 = scmp.ne.s32.totalorder %s72, %s86
      %p88 = scmp.eq.s32.totalorder %s20, 0
      %p89 = por %p87, %p88
      %s91 = sadd.s32 %s90, 1
      %p94 = scmp.eq.s32.totalorder %s14, 1
      %p95 = scmp.ne.s32.totalorder %s90, %s92
      %p96 = scmp.eq.s32.totalorder %s14, 0
      %p97 = por %p95, %p96
      %p98 = scmp.ne.s32.totalorder %s90, %s92
      %p99 = scmp.eq.s32.totalorder %s19, 1
      %p100 = por %p98, %p99
      %p101 = scmp.ne.s32.totalorder %s92, %s93
      %p102 = scmp.eq.s32.totalorder %s19, 0
      %p103 = por %p101, %p102
      %p104 = scmp.ne.s32.totalorder %s92, %s93
      %p105 = scmp.eq.s32.totalorder %s20, 1
      %p106 = por %p104, %p105
      %p108 = scmp.ne.s32.totalorder %s93, %s107
      %p109 = scmp.eq.s32.totalorder %s20, 0
      %p110 = por %p108, %p109
      %p111 = scmp.le.s32.totalorder 1, %s14
      %p112 = scmp.lt.s32.totalorder %s14, 3
      %p113 = pnand %p111, %p112
      %p114 = pneg %p113
      // Predicated region
      $region9: #{tpu_custom_call.1} parent=5 // pred_check
        _
      $region10: #{tpu_custom_call.1} parent=5 // pred_check_branch
        %116 = sbr.rel (%p113) target = $region12
      $region11: #{tpu_custom_call.1} parent=5 // pred_region
        %s117 = ssub.s32 %s14, 1
        // Predicated region
        $region13: #{tpu_custom_call.1} parent=11 // pred_check
          %p118 = pneg %p61
        $region14: #{tpu_custom_call.1} parent=11 // pred_check_branch
          %120 = sbr.rel (%p118) target = $region16
        $region15: #{tpu_custom_call.1} parent=11 // pred_region
          %s122 = ssub.s32 256, 256
          %123 = vsyncadd [#allocation11], %s122
          %s124 = sshll.u32 [#allocation10], 4
          %s125 = int_to_ptr.vmem [resolvable:$true] %s124
          %130 = dma.hbm_to_vmem [thread:$0]  %s1, 256, %s125, [#allocation11], 128, 128, 8
        $region16: #{tpu_custom_call.1} parent=11 // pred_fallthru
          _
        // Predicated region
        $region17: #{tpu_custom_call.1} parent=11 // pred_check
          %p131 = pneg %p82
        $region18: #{tpu_custom_call.1} parent=11 // pred_check_branch
          %133 = sbr.rel (%p131) target = $region20
        $region19: #{tpu_custom_call.1} parent=11 // pred_region
          _
        $region20: #{tpu_custom_call.1} parent=11 // pred_fallthru
          _
      $region12: #{tpu_custom_call.1} parent=5 // pred_fallthru
        _
      %p134 = scmp.lt.s32.totalorder %s14, 2
      // Predicated region
      $region21: #{tpu_custom_call.1} parent=5 // pred_check
        %p135 = pneg %p134
      $region22: #{tpu_custom_call.1} parent=5 // pred_check_branch
        %137 = sbr.rel (%p135) target = $region24
      $region23: #{tpu_custom_call.1} parent=5 // pred_region
        // Predicated region
        $region25: #{tpu_custom_call.1} parent=23 // pred_check
          %p138 = pneg %p34
        $region26: #{tpu_custom_call.1} parent=23 // pred_check_branch
          %140 = sbr.rel (%p138) target = $region28
        $region27: #{tpu_custom_call.1} parent=23 // pred_region
          %s141 = sand.u32 %s24, 1
          %s142 = scalar_lea.sflag [#allocation8], %s141
          %s143 = sand.u32 %s24, 1
          %s144 = smul.addr %s143, 8
          %s145 = scalar_lea.vmem [#allocation7], %s144
          %s147 = ssub.s32 128, 128
          %148 = vsyncadd %s142, %s147
          %s149 = smul.addr %s14, 128
          %s150 = scalar_lea.hbm %s0, %s149
          %s152 = sshll.u32 %s145, 4
          %s153 = int_to_ptr.vmem [resolvable:$true] %s152
          %155 = dma.hbm_to_vmem [thread:$0]  %s150, 128, %s153, %s142
        $region28: #{tpu_custom_call.1} parent=23 // pred_fallthru
          _
      $region24: #{tpu_custom_call.1} parent=5 // pred_fallthru
        _
      %p156 = scmp.le.s32.totalorder 1, %s14
      %p157 = scmp.lt.s32.totalorder %s14, 3
      %p158 = pnand %p156, %p157
      %p159 = pneg %p158
      // Predicated region
      $region29: #{tpu_custom_call.1} parent=5 // pred_check
        _
      $region30: #{tpu_custom_call.1} parent=5 // pred_check_branch
        %161 = sbr.rel (%p158) target = $region32
      $region31: #{tpu_custom_call.1} parent=5 // pred_region
        %s162 = ssub.s32 %s14, 1
        %s163 = sand.u32 %s27, 1
        %s164 = scalar_lea.sflag [#allocation8], %s163
        %s165 = sand.u32 %s27, 1
        %s166 = smul.addr %s165, 8
        %s167 = scalar_lea.vmem [#allocation7], %s166
        // Predicated region
        $region33: #{tpu_custom_call.1} parent=31 // pred_check
          %p168 = pneg %p40
        $region34: #{tpu_custom_call.1} parent=31 // pred_check_branch
          %170 = sbr.rel (%p168) target = $region36
        $region35: #{tpu_custom_call.1} parent=31 // pred_region
          %171 = dma.done %s164, 128
        $region36: #{tpu_custom_call.1} parent=31 // pred_fallthru
          _
        // Predicated region
        $region37: #{tpu_custom_call.1} parent=31 // pred_check
          %p172 = pneg %p61
        $region38: #{tpu_custom_call.1} parent=31 // pred_check_branch
          %174 = sbr.rel (%p172) target = $region40
        $region39: #{tpu_custom_call.1} parent=31 // pred_region
          %175 = dma.done [#allocation11], 256
        $region40: #{tpu_custom_call.1} parent=31 // pred_fallthru
          _
        %s176 = sand.u32 %s27, 1
        %s177 = scalar_lea.sflag [#allocation8], %s176
        %s178 = sand.u32 %s27, 1
        %s179 = smul.addr %s178, 8
        %s180 = scalar_lea.vmem [#allocation7], %s179
        %p181 = pneg %p40
        %p182 = pneg %p37
        %p183 = pneg %p61
        %p184 = pneg %p58
        %p185 = pneg %p82
        %p186 = pneg %p79
        %p187 = pneg %p103
        %p188 = pneg %p100
        %p190 = scmp.eq.s32.totalorder %s19, 0
        // Predicated region
        $region41: #{tpu_custom_call.1} parent=31 // pred_check
          %p191 = pneg %p190
        $region42: #{tpu_custom_call.1} parent=31 // pred_check_branch
          %193 = sbr.rel (%p191) target = $region44
        $region43: #{tpu_custom_call.1} parent=31 // pred_region
          %v194 = vld [vmem:[#allocation10] sm:$0xff]
          %v195 = vld [vmem:[#allocation10 + $0x8] sm:$0xff]
          %v196 = vmul.f32 %v194, %v194
          %v197 = vmul.f32 %v195, %v195
          %198 = vadd.xlane.f32.xlu0 %v196
          %v199 = vpop.xlane.xlu0 %198
          %200 = vadd.xlane.f32.xlu0 %v197
          %v201 = vpop.xlane.xlu0 %200
          %v202 = vmax.f32 %v199, 1e-24
          %v203 = vmax.f32 %v201, 1e-24
          %v204 = vrsqrt.pop %v202
          %v205 = vrsqrt.pop %v203
          %v206 = vmul.f32 %v194, %v204
          %v207 = vmul.f32 %v195, %v205
          %v208 = vpack.c.bf16 %v207, %v206
          %v210 = vunpack.c.l.b16 %v208
          %v211 = vunpack.c.h.b16 %v208
          %v212 = vpack.c.b16 %v210, %v210
          %v213 = vpack.c.b16 %v211, %v211
          %216 = vst [vmem:[#allocation2] sm:$0xf] %v212
          %217 = vst [vmem:[#allocation2 + $0x4] sm:$0xf] %v213
          %vm218 = vcmask 122880
          %219 = vst.msk [vmem:[#allocation3] sm:$0x1] %vm218, -inf
          %220 = vst.msk [vmem:[#allocation4] sm:$0x1] %vm218, 0.0
          %vm221 = vcmask 0
          %222 = vst.msk [vmem:[#allocation5] sm:$0x1] %vm221, 0.0
          %223 = vst.msk [vmem:[#allocation6] sm:$0x1] %vm221, 0.0
        $region44: #{tpu_custom_call.1} parent=31 // pred_fallthru
          _
        %v224 = vld [vmem:[%s167] sm:$0xff]
        %v225 = vmul.f32 %v224, %v224
        %226 = vadd.xlane.f32.xlu0 %v225
        %v227 = vpop.xlane.xlu0 %226
        %v228 = vmax.f32 %v227, 1e-24
        %v229 = vrsqrt.pop %v228
        %v230 = vmul.f32 %v229, 14.285714
        %v231 = vmul.f32 %v224, %v230
        %v232 = vpack.c.bf16 %v231, %v231
        %v233 = vld [vmem:[#allocation2] sm:$0xf]
        %v234 = vld [vmem:[#allocation2 + $0x4] sm:$0xf]
        %v237 = vunpack.c.l.b16 %v233
        %v238 = vunpack.c.l.b16 %v234
        %v239 = vpack.c.b16 %v238, %v237
        %241 = vmatprep.subr.bf16.mxu0 0
        %242 = vmatpush1.bf16.xpose.msra.mxu0 0
        %243 = vmatprep.subr.bf16.mxu0 0
        %244 = vmatpush1.bf16.xpose.msra.mxu0 0
        %245 = vmatprep.subr.bf16.mxu0 0
        %246 = vmatpush1.bf16.xpose.msra.mxu0 0
        %247 = vmatprep.subr.bf16.mxu0 0
        %248 = vmatpush1.bf16.xpose.msra.mxu0 0
        %249 = vmatprep.subr.bf16.mxu0 0
        %250 = vmatpush1.bf16.xpose.msra.mxu0 0
        %251 = vmatprep.subr.bf16.mxu0 0
        %252 = vmatpush1.bf16.xpose.msra.mxu0 0
        %253 = vmatprep.subr.bf16.mxu0 0
        %254 = vmatpush1.bf16.xpose.msra.mxu0 0
        %255 = vmatprep.subr.bf16.mxu0 0
        %256 = vmatpush1.bf16.xpose.msra.mxu0 %v239
        %257 = vmatprep.subr.bf16.mxu0 0
        %258 = vmatpush2.bf16.xpose.msra.mxu0 0
        %259 = vmatprep.subr.bf16.mxu0 0
        %260 = vmatpush2.bf16.xpose.msra.mxu0 0
        %261 = vmatprep.subr.bf16.mxu0 0
        %262 = vmatpush2.bf16.xpose.msra.mxu0 0
        %263 = vmatprep.subr.bf16.mxu0 0
        %264 = vmatpush2.bf16.xpose.msra.mxu0 0
        %265 = vmatprep.subr.bf16.mxu0 0
        %266 = vmatpush2.bf16.xpose.msra.mxu0 0
        %267 = vmatprep.subr.bf16.mxu0 0
        %268 = vmatpush2.bf16.xpose.msra.mxu0 0
        %269 = vmatprep.subr.bf16.mxu0 0
        %270 = vmatpush2.bf16.xpose.msra.mxu0 0
        %271 = vmatprep.subr.bf16.mxu0 0
        %272 = vmatpush2.bf16.xpose.msra.mxu0 0
        %273 = vmatprep.mubr.bf16.mxu0 0
        %274 = vmatmul.mubr.bf16.gmra.mxu0 %v232
        %v275 = vpop.f32.mrf.mxu0
        %v276 = vadd.f32 0.0, %v275
        %v277 = vpop.f32.mrf.mxu0
        %v278 = vpop.f32.mrf.mxu0
        %v279 = vpop.f32.mrf.mxu0
        %280 = vdwg.mxu0
        %s281 = smul.u32 %s19, 8
        %v282 = vlaneseq
        %v283 = vshrl.u32 %v282, 7
        %v284 = vstv %s281
        %v285 = vadd.s32 %v283, %v284
        %v286 = vlaneseq
        %v287 = vand.u32 %v286, 127
        %vm288 = vcmp.ne.s32.totalorder %v285, %v287
        %v289 = vsel %vm288, 0.0, %v276
        %vm290 = vcmask 130048
        %v291 = vsel %vm290, %v289, 0.0
        %292 = vadd.xlane.f32.xlu0 %v291
        %v293 = vpop.xlane.xlu0 %292
        %v294 = vld [vmem:[#allocation6] sm:$0x1]
        %v295 = vadd.f32 %v293, 0.0
        %v296 = vrot.slane %v295, 4
        %v297 = vadd.f32 %v295, %v296
        %v298 = vrot.slane %v297, 2
        %v299 = vadd.f32 %v297, %v298
        %v300 = vrot.slane %v299, 1
        %v301 = vadd.f32 %v299, %v300
        %v302 = vadd.f32 %v294, %v301
        %vm303 = vcmask 0
        %304 = vst.msk [vmem:[#allocation6] sm:$0x1] %vm303, %v302
        %v305 = vsel %vm290, %v276, -inf
        %306 = vmax.xlane.f32.xlu0 %v305
        %v307 = vpop.xlane.xlu0 %306
        %v308 = vsub.f32 %v276, %v307
        %v309 = vmul.f32 %v308, 1.442695
        %v310 = vpow.pop %v309
        %v311 = vsel %vm290, %v310, 0.0
        %312 = vadd.xlane.f32.xlu0 %v311
        %v313 = vpop.xlane.xlu0 %312
        %v314 = vlog2.pop %v313
        %v315 = vmul.f32 %v314, 0.6931472
        %v316 = vadd.f32 %v315, %v307
        %v317 = vld [vmem:[#allocation5] sm:$0x1]
        %v318 = vadd.f32 %v316, 0.0
        %v319 = vrot.slane %v318, 4
        %v320 = vadd.f32 %v318, %v319
        %v321 = vrot.slane %v320, 2
        %v322 = vadd.f32 %v320, %v321
        %v323 = vrot.slane %v322, 1
        %v324 = vadd.f32 %v322, %v323
        %v325 = vadd.f32 %v317, %v324
        %326 = vst.msk [vmem:[#allocation5] sm:$0x1] %vm303, %v325
        %v327 = vld [vmem:[#allocation3] sm:$0x1]
        %v328 = vrot.slane %v307, 4
        %v329 = vmax.f32 %v307, %v328
        %v330 = vrot.slane %v329, 2
        %v331 = vmax.f32 %v329, %v330
        %v332 = vrot.slane %v331, 1
        %v333 = vmax.f32 %v331, %v332
        %v334 = vmax.f32 %v327, %v333
        %v335 = vsub.f32 %v307, %v333
        %v336 = vmul.f32 %v335, 1.442695
        %v337 = vpow.pop %v336
        %v338 = vmul.f32 %v310, %v337
        %v339 = vsel %vm290, %v338, 0.0
        %v340 = vrot.slane %v339, 4
        %v341 = vadd.f32 %v339, %v340
        %v342 = vrot.slane %v341, 2
        %v343 = vadd.f32 %v341, %v342
        %v344 = vrot.slane %v343, 1
        %v345 = vadd.f32 %v343, %v344
        %v346 = vsub.f32 %v333, %v334
        %v347 = vmul.f32 %v346, 1.442695
        %v348 = vpow.pop %v347
        %v349 = vmul.f32 %v345, %v348
        %v350 = vld [vmem:[#allocation4] sm:$0x1]
        %v351 = vsub.f32 %v327, %v334
        %v352 = vmul.f32 %v351, 1.442695
        %v353 = vpow.pop %v352
        %v354 = vmul.f32 %v350, %v353
        %v355 = vadd.f32 %v354, %v349
        %vm356 = vcmask 122880
        %357 = vst.msk [vmem:[#allocation4] sm:$0x1] %vm356, %v355
        %358 = vst.msk [vmem:[#allocation3] sm:$0x1] %vm356, %v334
        %p359 = scmp.eq.s32.totalorder %s19, 1
        // Predicated region
        $region45: #{tpu_custom_call.1} parent=31 // pred_check
          %p360 = pneg %p359
        $region46: #{tpu_custom_call.1} parent=31 // pred_check_branch
          %362 = sbr.rel (%p360) target = $region48
        $region47: #{tpu_custom_call.1} parent=31 // pred_region
          %v363 = vld [vmem:[#allocation6] sm:$0x1]
          %v364 = vld [vmem:[#allocation4] sm:$0x1]
          %v365 = vlog2.pop %v364
          %v366 = vmul.f32 %v365, 0.6931472
          %v367 = vld [vmem:[#allocation3] sm:$0x1]
          %v368 = vadd.f32 %v366, %v367
          %v369 = vsel %vm356, %v368, 0.0
          %370 = vadd.xlane.f32.xlu0 %v369
          %v371 = vpop.xlane.xlu0 %370
          %v372 = vadd.f32 %v371, 0.0
          %v373 = vld [vmem:[#allocation5] sm:$0x1]
          %v374 = vadd.f32 %v373, %v372
          %v375 = vmul.f32 %v374, 0.5
          %v376 = vrcp.pop 16.0
          %v377 = vmul.f32 %v375, %v376
          %v378 = vmul.f32 %v363, %v376
          %v379 = vsub.f32 %v377, %v378
          %380 = vst.msk [vmem:[#allocation12] sm:$0x1] %vm303, %v379
        $region48: #{tpu_custom_call.1} parent=31 // pred_fallthru
          _
        // Predicated region
        $region49: #{tpu_custom_call.1} parent=31 // pred_check
          %p381 = pneg %p100
        $region50: #{tpu_custom_call.1} parent=31 // pred_check_branch
          %383 = sbr.rel (%p381) target = $region52
        $region51: #{tpu_custom_call.1} parent=31 // pred_region
          %s385 = ssub.s32 16, 16
          %386 = vsyncadd [#allocation9], %s385
          %s388 = sshll.u32 [#allocation12], 4
          %s389 = int_to_ptr.vmem [resolvable:$true] %s388
          %391 = dma.vmem_to_hbm [thread:$0]  %s389, 16, %s3, [#allocation9]
        $region52: #{tpu_custom_call.1} parent=31 // pred_fallthru
          _
        // Predicated region
        $region53: #{tpu_custom_call.1} parent=31 // pred_check
          %p392 = pneg %p100
        $region54: #{tpu_custom_call.1} parent=31 // pred_check_branch
          %394 = sbr.rel (%p392) target = $region56
        $region55: #{tpu_custom_call.1} parent=31 // pred_region
          %395 = dma.done [#allocation9], 16
        $region56: #{tpu_custom_call.1} parent=31 // pred_fallthru
          _
      $region32: #{tpu_custom_call.1} parent=5 // pred_fallthru
        _
      %p396 = scmp.le.s32.totalorder 2, %s14
      // Predicated region
      $region57: #{tpu_custom_call.1} parent=5 // pred_check
        %p397 = pneg %p396
      $region58: #{tpu_custom_call.1} parent=5 // pred_check_branch
        %399 = sbr.rel (%p397) target = $region60
      $region59: #{tpu_custom_call.1} parent=5 // pred_region
        %s400 = ssub.s32 %s14, 2
      $region60: #{tpu_custom_call.1} parent=5 // pred_fallthru
        _
    $region6: #{tpu_custom_call.1} parent=1 // loop_footer
      %s18 = sadd.s32 1, %s14
    $region7: #{tpu_custom_call.1} parent=1 // loop_footer_branch
      %13 = sbr.rel target = $region3
    $region8: #{tpu_custom_call.1} parent=1 // loop_exit
      _
    %401 = vsyncpa [#allocation8], 1
    %s402 = scalar_lea.sflag [#allocation8], 1
    %403 = vsyncpa %s402, 1
    %404 = vsyncpa [#allocation11], 1
    %405 = vsyncpa [#allocation9], 1
    %s406 = scalar_lea.sflag [#allocation9], 1
    %407 = vsyncpa %s406, 1

</llo_original>
